<compile_context>
chip_gen: v6e
topology: v6e:2x2x1
jax: 0.10.0
libtpu: 0.0.40
codegen_flags: <defaults>
</compile_context>

<pallas_src>
import math

import jax
import jax.numpy as jnp
from jax.experimental import pallas as pl
from jax.experimental.pallas import tpu as pltpu

# ---- shapes consistent with the module (small) ----
BATCH = 2
SEQ = 8
D_MODEL = 32
MAX_LEN = 16  # max_len >= SEQ; table is sliced to SEQ like the PyTorch forward


def make_encoding_table(max_len: int, d_model: int) -> jnp.ndarray:
    """Reproduce PositionalEncoding.__init__ exactly (sin on even, cos on odd)."""
    assert d_model % 2 == 0, "d_model must be even (matches the PyTorch table layout)"
    position = jnp.arange(max_len, dtype=jnp.float32)[:, None]              # (L, 1)
    div_term = jnp.exp(
        jnp.arange(0, d_model, 2, dtype=jnp.float32)
        * (-math.log(10000.0) / d_model))                                   # (D/2,)
    ang = position * div_term                                               # (L, D/2)
    enc = jnp.zeros((max_len, d_model), jnp.float32)
    enc = enc.at[:, 0::2].set(jnp.sin(ang))
    enc = enc.at[:, 1::2].set(jnp.cos(ang))
    return enc


# --------------------------------------------------------------------------
# Small path: whole problem folded to (rows, 128), one step, no grid.
# --------------------------------------------------------------------------
def _posenc_fold_kernel(x_ref, enc_ref, out_ref):
    """x_ref, enc_ref, out_ref: (rows, 128) f32 in VMEM -- pure VPU add."""
    out_ref[...] = x_ref[...] + enc_ref[...]


def _posenc_small(x: jnp.ndarray, enc: jnp.ndarray) -> jnp.ndarray:
    """x: (B, S, D), enc: (S, D). Fold everything onto 128 lanes."""
    B, S, D = x.shape
    n = B * S * D
    rows = n // 128
    x2 = x.reshape(rows, 128)
    # Pre-broadcast the table host-side (tiny) so the kernel add has no
    # in-kernel broadcast at all.
    enc2 = jnp.broadcast_to(enc[None], (B, S, D)).reshape(rows, 128)

    out2 = pl.pallas_call(
        _posenc_fold_kernel,
        out_shape=jax.ShapeDtypeStruct((rows, 128), x.dtype),
        in_specs=[
            pl.BlockSpec(memory_space=pltpu.MemorySpace.VMEM),   # x (full array)
            pl.BlockSpec(memory_space=pltpu.MemorySpace.VMEM),   # enc (full array)
        ],
        out_specs=pl.BlockSpec(memory_space=pltpu.MemorySpace.VMEM),
        input_output_aliases={0: 0},
        cost_estimate=pl.CostEstimate(
            flops=n, transcendentals=0, bytes_accessed=3 * n * x.dtype.itemsize),
    )(x2, enc2)
    return out2.reshape(B, S, D)


# --------------------------------------------------------------------------
# Scalable path: grid over (seq_tiles, batch_tiles); batch is the fastest
# axis and the enc block index depends only on the seq tile, so the table is
# DMA'd once per seq tile and reused across the batch steps.
# --------------------------------------------------------------------------
def _posenc_tiled_kernel(x_ref, enc_ref, out_ref):
    """x_ref/out_ref: (tb, ts, D); enc_ref: (ts, D).

    Broadcasting over the leading (non-vreg) batch dim is plain vreg reuse --
    no XLU work, the add stays a single VPU op per vreg.
    """
    out_ref[...] = x_ref[...] + enc_ref[...]


def _posenc_tiled(x: jnp.ndarray, enc: jnp.ndarray, *,
                  seq_tile: int | None = None,
                  batch_tile: int | None = None) -> jnp.ndarray:
    B, S, D = x.shape
    if batch_tile is None:
        batch_tile = 8 if B % 8 == 0 else B          # >=8 sublanes when possible
    if seq_tile is None:
        seq_tile = S                                  # full S is always legal
        for cand in (1024, 512, 256, 128, 64, 32, 16, 8):
            if S % cand == 0:
                seq_tile = cand
                break
    assert B % batch_tile == 0 and S % seq_tile == 0

    n = B * S * D
    grid = (S // seq_tile, B // batch_tile)           # batch (last axis) is fastest

    return pl.pallas_call(
        _posenc_tiled_kernel,
        out_shape=jax.ShapeDtypeStruct(x.shape, x.dtype),
        grid_spec=pltpu.PrefetchScalarGridSpec(
            num_scalar_prefetch=0,
            grid=grid,
            in_specs=[
                pl.BlockSpec((batch_tile, seq_tile, D), lambda s, b: (b, s, 0)),
                pl.BlockSpec((seq_tile, D), lambda s, b: (s, 0)),   # reused over batch
            ],
            out_specs=pl.BlockSpec((batch_tile, seq_tile, D), lambda s, b: (b, s, 0)),
        ),
        input_output_aliases={0: 0},
        cost_estimate=pl.CostEstimate(
            flops=n, transcendentals=0,
            bytes_accessed=2 * n * x.dtype.itemsize + S * D * enc.dtype.itemsize),
        compiler_params=pltpu.CompilerParams(
            dimension_semantics=("parallel", "parallel"),   # v7x: both TensorCores
            vmem_limit_bytes=32 * 1024 * 1024),              # safe on v5e/v6e/v7x
    )(x, enc)


# --------------------------------------------------------------------------
# Public wrapper: reproduces PositionalEncoding.forward
# --------------------------------------------------------------------------
def positional_encoding(x: jnp.ndarray, enc_table: jnp.ndarray,
                        *, small_bytes: int = 2 << 20) -> jnp.ndarray:
    """x: (B, S, D) f32, enc_table: (max_len, D) f32. Returns x + enc_table[:S]."""
    B, S, D = x.shape
    enc = enc_table[:S]                    # == self.encoding[:, :x.size(1)]
    n = B * S * D
    if n % 128 == 0 and n * x.dtype.itemsize <= small_bytes:
        return _posenc_small(x, enc)
    return _posenc_tiled(x, enc)


def _reference(x: jnp.ndarray, enc_table: jnp.ndarray) -> jnp.ndarray:
    """Pure-JAX reference reproducing the PyTorch forward."""
    return x + enc_table[: x.shape[1]][None, :, :]


if __name__ == "__main__":
    key = jax.random.PRNGKey(0)

    # ---- primary test at the module's small shapes ----
    x = jax.random.normal(key, (BATCH, SEQ, D_MODEL), dtype=jnp.float32)
    enc_table = make_encoding_table(MAX_LEN, D_MODEL)

    fwd = jax.jit(positional_encoding)
    out = jax.block_until_ready(fwd(x, enc_table))
    ref = jax.block_until_ready(_reference(x, enc_table))
    assert out.shape == (BATCH, SEQ, D_MODEL)
    assert jnp.allclose(out, ref, atol=1e-6, rtol=1e-6), "small-path mismatch vs reference"

    # ---- also exercise the scalable grid path (larger, still small) ----
    xb = jax.random.normal(jax.random.PRNGKey(1), (4, 64, 128), dtype=jnp.float32)
    encb = make_encoding_table(64, 128)
    tiled = jax.jit(lambda a, e: _posenc_tiled(a, e[: a.shape[1]],
                                               seq_tile=16, batch_tile=2))
    outb = jax.block_until_ready(tiled(xb, encb))
    refb = jax.block_until_ready(_reference(xb, encb))
    assert jnp.allclose(outb, refb, atol=1e-6, rtol=1e-6), "tiled-path mismatch vs reference"

    print("KERNEL_OK")
</pallas_src>

<mosaic_0001>
module attributes {stable_mosaic.version = 11 : i64} {
  func.func @_posenc_fold_kernel(%arg0: memref<4x128xf32, #tpu.memory_space<vmem>>, %arg1: memref<4x128xf32, #tpu.memory_space<vmem>>, %arg2: memref<4x128xf32, #tpu.memory_space<vmem>>) attributes {dimension_semantics = [], scalar_prefetch = 0 : i64, scratch_operands = 0 : i64, tpu.core_type = #tpu.core_type<tc>} {
    %c0 = arith.constant 0 : index
    %c0_0 = arith.constant 0 : index
    %0 = vector.load %arg0[%c0, %c0_0] : memref<4x128xf32, #tpu.memory_space<vmem>>, vector<4x128xf32>
    %c0_1 = arith.constant 0 : index
    %c0_2 = arith.constant 0 : index
    %1 = vector.load %arg1[%c0_1, %c0_2] : memref<4x128xf32, #tpu.memory_space<vmem>>, vector<4x128xf32>
    %2 = arith.addf %0, %1 : vector<4x128xf32>
    %c0_3 = arith.constant 0 : index
    %c0_4 = arith.constant 0 : index
    %3 = vector.load %arg2[%c0_3, %c0_4] : memref<4x128xf32, #tpu.memory_space<vmem>>, vector<4x128xf32>
    tpu.vector_store %arg2[%c0_3, %c0_4], %2 {strides = array<i32>} : memref<4x128xf32, #tpu.memory_space<vmem>>, vector<4x128xf32>,
    return
  }
}

</mosaic_0001>

<llo_original>
// kernel: positional_encoding.1
$region0: #{positional_encoding.1}
  #allocation0 [shape = 'u32[]', space=smem, size = 0x4, offset = 0x4, fixed_abs, tag = 'smem constant byte address 0x4 - core index']
  #allocation1 [shape = 'u32[144,128]{1,0:T(1,128)}', space=vmem, size = 0x12000, scoped, tag = 'internal scratch']
  %s0 = inlined_call_operand.vmem [shape: f32[4,128], index: 0, kind: input, shape index: {}, may-alias: {0,2}]
  %s1 = inlined_call_operand.vmem [shape: f32[4,128], index: 1, kind: input, shape index: {}]
  %s2 = inlined_call_operand.vmem [shape: f32[4,128], index: 2, kind: output, shape index: {}, may-alias: {0,2}]
  %s3 = sld [smem:[#allocation0]]
  $region18: #{positional_encoding.1} parent=0
    _
  %s5 = ssub.s32 1, %s3
  %s6 = scalar_select 0, %s5, %s3
  // Predicated region
  $region2: #{positional_encoding.1} parent=0 // pred_check
    _
  $region3: #{positional_encoding.1} parent=0 // pred_check_branch
    %8 = sbr.rel (0) target = $region5
  $region4: #{positional_encoding.1} parent=0 // pred_region
    _
  $region5: #{positional_encoding.1} parent=0 // pred_fallthru
    _
  // Predicated region
  $region6: #{positional_encoding.1} parent=0 // pred_check
    _
  $region7: #{positional_encoding.1} parent=0 // pred_check_branch
    %10 = sbr.rel (0) target = $region9
  $region8: #{positional_encoding.1} parent=0 // pred_region
    _
  $region9: #{positional_encoding.1} parent=0 // pred_fallthru
    _
  %v11 = vld [vmem:[%s0] sm:$0xf]
  %v12 = vld [vmem:[%s1] sm:$0xf]
  %v13 = vadd.f32 %v11, %v12
  %14 = vst [vmem:[%s2] sm:$0xf] %v13
  // Predicated region
  $region10: #{positional_encoding.1} parent=0 // pred_check
    _
  $region11: #{positional_encoding.1} parent=0 // pred_check_branch
    %16 = sbr.rel (0) target = $region13
  $region12: #{positional_encoding.1} parent=0 // pred_region
    _
  $region13: #{positional_encoding.1} parent=0 // pred_fallthru
    _
  // Predicated region
  $region14: #{positional_encoding.1} parent=0 // pred_check
    _
  $region15: #{positional_encoding.1} parent=0 // pred_check_branch
    %18 = sbr.rel (0) target = $region17
  $region16: #{positional_encoding.1} parent=0 // pred_region
    _
  $region17: #{positional_encoding.1} parent=0 // pred_fallthru
    _

</llo_original>
